<compile_context>
chip_gen: v5e
topology: v5e:2x2
jax: 0.10.0
libtpu: 0.0.40
codegen_flags: <defaults>
</compile_context>

<pallas_src>
import functools

import jax
import jax.numpy as jnp
from jax.experimental import pallas as pl
from jax.experimental.pallas import tpu as pltpu

SCALE_EPS = 0.01   # added to softplus output so scale > 0 (synthetic likelihood head)
NEG_BIG = -1e30    # "minus infinity" for padded classes (exp underflows to 0, no NaN/Inf)


def _softplus(x):
    # numerically stable softplus (same fn used in wrapper precompute + reference)
    return jnp.maximum(x, 0.0) + jnp.log(1.0 + jnp.exp(-jnp.abs(x)))


def _bayes_rule_kernel(zd_ref, a_ref, bq_ref, c0_ref, out_ref):
    # zd_ref: (TB, Z); a_ref, bq_ref: (Z, DP); c0_ref: (1, DP); out_ref: (TB, DP)
    zd = zd_ref[...]
    # prob[b, d] = c0[d] + zd @ A[:, d] - zd^2 @ Bq[:, d]   (two MXU matmuls, f32 accumulate)
    prob = (jnp.dot(zd, a_ref[...], preferred_element_type=jnp.float32)
            - jnp.dot(zd * zd, bq_ref[...], preferred_element_type=jnp.float32)
            + c0_ref[...])
    # stabilized log-softmax over the (padded) class lanes; padded lanes hold NEG_BIG.
    m = jnp.max(prob, axis=1, keepdims=True)
    p = prob - m
    lse = jnp.log(jnp.sum(jnp.exp(p), axis=1, keepdims=True))
    out_ref[...] = p - lse


def _pick_tile_b(b_padded, requested):
    if requested is not None:
        assert requested % 8 == 0 and b_padded % requested == 0
        return requested
    # largest power-of-two tile (multiple of 8, capped for VMEM) giving >= 2 grid steps
    for tb in (1024, 512, 256, 128, 64, 32, 16, 8):
        if b_padded % tb == 0 and b_padded // tb >= 2:
            return tb
    return b_padded


@functools.partial(jax.jit, static_argnames=("tile_b",))
def bayes_rule(zd, w_loc, b_loc, w_scale, b_scale, *, tile_b=None):
    zd = zd.astype(jnp.float32)
    B, Z = zd.shape
    D = w_loc.shape[0]

    # ---- hoisted likelihood-parameter precompute (once per call, O(D*Z)) ----
    loc = w_loc + b_loc[None, :]                                  # (D, Z)
    scale = _softplus(w_scale + b_scale[None, :]) + SCALE_EPS     # (D, Z)
    inv_s2 = 1.0 / (scale * scale)
    a_mat = (loc * inv_s2).T                                      # (Z, D)  coeff of zd
    bq_mat = (0.5 * inv_s2).T                                     # (Z, D)  coeff of zd^2
    c0 = jnp.sum(-jnp.log(scale) - 0.5 * loc * loc * inv_s2, axis=1)   # (D,)

    # ---- lane-dense padding of the class dim: D -> DP (multiple of 128) ----
    DP = -(-D // 128) * 128
    a_p = jnp.pad(a_mat, ((0, 0), (0, DP - D)))
    bq_p = jnp.pad(bq_mat, ((0, 0), (0, DP - D)))
    c0_p = jnp.pad(c0, (0, DP - D), constant_values=NEG_BIG).reshape(1, DP)

    # ---- batch padding to a sublane multiple + tile selection ----
    BP = -(-B // 8) * 8
    zd_p = jnp.pad(zd, ((0, BP - B), (0, 0)))
    tb = _pick_tile_b(BP, tile_b)

    out_p = pl.pallas_call(
        _bayes_rule_kernel,
        out_shape=jax.ShapeDtypeStruct((BP, DP), jnp.float32),
        grid=(BP // tb,),
        in_specs=[
            pl.BlockSpec((tb, Z), lambda i: (i, 0)),   # zd batch tile (pipelined)
            pl.BlockSpec((Z, DP), lambda i: (0, 0)),   # A  (replicated -> DMA'd once)
            pl.BlockSpec((Z, DP), lambda i: (0, 0)),   # Bq (replicated -> DMA'd once)
            pl.BlockSpec((1, DP), lambda i: (0, 0)),   # c0 (replicated -> DMA'd once)
        ],
        out_specs=pl.BlockSpec((tb, DP), lambda i: (i, 0)),
        compiler_params=pltpu.CompilerParams(dimension_semantics=("parallel",)),
    )(zd_p, a_p, bq_p, c0_p)

    return out_p[:B, :D]


def bayes_rule_ref(zd, w_loc, b_loc, w_scale, b_scale):
    """Pure-JAX transliteration of the torch forward (repeat / view / sum / log-softmax)."""
    B, Z = zd.shape
    D = w_loc.shape[0]
    eye = jnp.eye(D, dtype=zd.dtype)
    zd_r = jnp.tile(zd, (D, 1))                       # (D*B, Z)
    d_r = jnp.tile(eye, (1, B)).reshape(-1, D)        # (D*B, D)
    loc = d_r @ w_loc + b_loc
    scale = _softplus(d_r @ w_scale + b_scale) + SCALE_EPS
    lp = -jnp.log(scale) - ((zd_r - loc) / scale) ** 2 / 2
    prob = jnp.sum(lp, axis=1).reshape(D, -1).T       # (B, D)
    m = jnp.max(prob, axis=1, keepdims=True)
    prob = prob - m
    return prob - jnp.log(jnp.sum(jnp.exp(prob), axis=1, keepdims=True))


def _run_case(key, B, Z, D):
    k1, k2, k3, k4, k5 = jax.random.split(key, 5)
    zd = jax.random.normal(k1, (B, Z), dtype=jnp.float32)
    # deterministic synthetic likelihood parameters (no checkpoint load)
    w_loc = 0.5 * jax.random.normal(k2, (D, Z), dtype=jnp.float32)
    b_loc = 0.1 * jax.random.normal(k3, (Z,), dtype=jnp.float32)
    w_scale = 0.5 * jax.random.normal(k4, (D, Z), dtype=jnp.float32)
    b_scale = 0.1 * jax.random.normal(k5, (Z,), dtype=jnp.float32)

    out = jax.block_until_ready(bayes_rule(zd, w_loc, b_loc, w_scale, b_scale))
    ref = bayes_rule_ref(zd, w_loc, b_loc, w_scale, b_scale)

    assert out.shape == (B, D), out.shape
    # log-softmax rows must normalize (logsumexp over classes ~ 0)
    assert float(jnp.max(jnp.abs(jax.nn.logsumexp(out, axis=1)))) < 1e-4, "rows not normalized"
    # expand-the-square + MXU accumulation => slightly looser tolerance than elementwise form
    assert jnp.allclose(out, ref, atol=1e-3, rtol=1e-3), (out, ref)


if __name__ == "__main__":
    key = jax.random.PRNGKey(0)
    k_a, k_b = jax.random.split(key)
    _run_case(k_a, B=8, Z=32, D=5)    # module-scale shapes (single-tile grid)
    _run_case(k_b, B=32, Z=32, D=5)   # multi-step grid exercises the pipelined/parallel path
    print("KERNEL_OK")
</pallas_src>

<mosaic_0001>
module attributes {stable_mosaic.version = 11 : i64} {
  func.func @_bayes_rule_kernel(%arg0: i32, %arg1: memref<8x32xf32, #tpu.memory_space<vmem>>, %arg2: memref<32x128xf32, #tpu.memory_space<vmem>>, %arg3: memref<32x128xf32, #tpu.memory_space<vmem>>, %arg4: memref<1x128xf32, #tpu.memory_space<vmem>>, %arg5: memref<8x128xf32, #tpu.memory_space<vmem>>) attributes {dimension_semantics = [#tpu.dimension_semantics<parallel>], iteration_bounds = array<i64: 1>, scalar_prefetch = 0 : i64, scratch_operands = 0 : i64, tpu.core_type = #tpu.core_type<tc>, window_params = [{transform_indices = @transform_0, window_bounds = array<i64: 8, 32>}, {pipeline_mode = #tpu.pipeline_mode<synchronous>, transform_indices = @transform_1, window_bounds = array<i64: 32, 128>}, {pipeline_mode = #tpu.pipeline_mode<synchronous>, transform_indices = @transform_2, window_bounds = array<i64: 32, 128>}, {pipeline_mode = #tpu.pipeline_mode<synchronous>, transform_indices = @transform_3, window_bounds = array<i64: 1, 128>}, {transform_indices = @transform_4, window_bounds = array<i64: 8, 128>}]} {
    %c0 = arith.constant 0 : index
    %c0_0 = arith.constant 0 : index
    %0 = vector.load %arg1[%c0, %c0_0] : memref<8x32xf32, #tpu.memory_space<vmem>>, vector<8x32xf32>
    %c0_1 = arith.constant 0 : index
    %c0_2 = arith.constant 0 : index
    %1 = vector.load %arg2[%c0_1, %c0_2] : memref<32x128xf32, #tpu.memory_space<vmem>>, vector<32x128xf32>
    %cst = arith.constant dense<0.000000e+00> : vector<8x128xf32>
    %2 = tpu.matmul %0, %1, %cst {dimension_numbers = #tpu.dot_dimension_numbers<[1], [0], [0], [1], [0, 0, 1, 1], [], []>} : vector<8x32xf32>, vector<32x128xf32>, vector<8x128xf32> -> vector<8x128xf32>
    %3 = arith.mulf %0, %0 : vector<8x32xf32>
    %c0_3 = arith.constant 0 : index
    %c0_4 = arith.constant 0 : index
    %4 = vector.load %arg3[%c0_3, %c0_4] : memref<32x128xf32, #tpu.memory_space<vmem>>, vector<32x128xf32>
    %cst_5 = arith.constant dense<0.000000e+00> : vector<8x128xf32>
    %5 = tpu.matmul %3, %4, %cst_5 {dimension_numbers = #tpu.dot_dimension_numbers<[1], [0], [0], [1], [0, 0, 1, 1], [], []>} : vector<8x32xf32>, vector<32x128xf32>, vector<8x128xf32> -> vector<8x128xf32>
    %6 = arith.subf %2, %5 : vector<8x128xf32>
    %c0_6 = arith.constant 0 : index
    %c0_7 = arith.constant 0 : index
    %7 = vector.load %arg4[%c0_6, %c0_7] : memref<1x128xf32, #tpu.memory_space<vmem>>, vector<1x128xf32>
    %8 = vector.broadcast %7 : vector<1x128xf32> to vector<8x128xf32>
    %9 = arith.addf %6, %8 : vector<8x128xf32>
    %cst_8 = arith.constant dense<0xFF800000> : vector<8xf32>
    %10 = vector.multi_reduction <maximumf>, %9, %cst_8 [1] : vector<8x128xf32> to vector<8xf32>
    %11 = vector.shape_cast %10 : vector<8xf32> to vector<8x1xf32>
    %12 = vector.broadcast %11 : vector<8x1xf32> to vector<8x128xf32>
    %13 = arith.subf %9, %12 : vector<8x128xf32>
    %14 = math.exp %13 : vector<8x128xf32>
    %cst_9 = arith.constant dense<0.000000e+00> : vector<8xf32>
    %15 = vector.multi_reduction <add>, %14, %cst_9 [1] : vector<8x128xf32> to vector<8xf32>
    %16 = vector.shape_cast %15 : vector<8xf32> to vector<8x1xf32>
    %17 = math.log %16 : vector<8x1xf32>
    %18 = vector.broadcast %17 : vector<8x1xf32> to vector<8x128xf32>
    %19 = arith.subf %13, %18 : vector<8x128xf32>
    %c0_10 = arith.constant 0 : index
    %c0_11 = arith.constant 0 : index
    %20 = vector.load %arg5[%c0_10, %c0_11] : memref<8x128xf32, #tpu.memory_space<vmem>>, vector<8x128xf32>
    tpu.vector_store %arg5[%c0_10, %c0_11], %19 {strides = array<i32>} : memref<8x128xf32, #tpu.memory_space<vmem>>, vector<8x128xf32>,
    return
  }
  func.func @transform_0(%arg0: i32) -> (i32, i32) {
    %c0_i32 = arith.constant 0 : i32
    %c0_i32_0 = arith.constant 0 : i32
    return %arg0, %c0_i32 : i32, i32
  }
  func.func @transform_1(%arg0: i32) -> (i32, i32) {
    %c0_i32 = arith.constant 0 : i32
    %c0_i32_0 = arith.constant 0 : i32
    %c0_i32_1 = arith.constant 0 : i32
    return %c0_i32, %c0_i32_0 : i32, i32
  }
  func.func @transform_2(%arg0: i32) -> (i32, i32) {
    %c0_i32 = arith.constant 0 : i32
    %c0_i32_0 = arith.constant 0 : i32
    %c0_i32_1 = arith.constant 0 : i32
    return %c0_i32, %c0_i32_0 : i32, i32
  }
  func.func @transform_3(%arg0: i32) -> (i32, i32) {
    %c0_i32 = arith.constant 0 : i32
    %c0_i32_0 = arith.constant 0 : i32
    %c0_i32_1 = arith.constant 0 : i32
    return %c0_i32, %c0_i32_0 : i32, i32
  }
  func.func @transform_4(%arg0: i32) -> (i32, i32) {
    %c0_i32 = arith.constant 0 : i32
    %c0_i32_0 = arith.constant 0 : i32
    return %arg0, %c0_i32 : i32, i32
  }
}

</mosaic_0001>

<llo_original>
// kernel: bayes_rule.1
$region0: #{bayes_rule.1}
  #allocation0 [shape = 'u32[]', space=smem, size = 0x4, offset = 0x4, fixed_abs, tag = 'smem constant byte address 0x4 - core index']
  #allocation1 [shape = 'u32[72,128]{1,0:T(1,128)}', space=vmem, size = 0x9000, scoped, tag = 'internal scratch']
  %s0 = inlined_call_operand.vmem [shape: f32[8,32], index: 0, kind: input, shape index: {}]
  %s1 = inlined_call_operand.vmem [shape: f32[32,128], index: 1, kind: input, shape index: {}]
  %s2 = inlined_call_operand.vmem [shape: f32[32,128], index: 2, kind: input, shape index: {}]
  %s3 = inlined_call_operand.vmem [shape: f32[1,128], index: 3, kind: input, shape index: {}]
  %s4 = inlined_call_operand.hbm [shape: f32[8,128], index: 4, kind: output, shape index: {}]
  %s5 = sld [smem:[#allocation0]]
  $region26: #{bayes_rule.1} parent=0
    _
  %s7 = ssub.s32 1, %s5
  %s8 = scalar_select 0, %s7, %s5
  $region1: #{bayes_rule.1} parent=0
    #allocation2 [shape = 'u8[4096]{0}', space=vmem, size = 0x1000, scoped, tag = 'output window, operand 0, single buffered']
    #allocation3 [shape = 's32[1]{0}', space=sflag, size = 0x4, scoped, tag = 'scoped memory for bayes_rule.1']
    %9 = vsyncpa [#allocation3], 0
    // Predicated region
    $region2: #{bayes_rule.1} parent=1 // pred_check
      _
    $region3: #{bayes_rule.1} parent=1 // pred_check_branch
      %11 = sbr.rel (0) target = $region5
    $region4: #{bayes_rule.1} parent=1 // pred_region
      _
    $region5: #{bayes_rule.1} parent=1 // pred_fallthru
      _
    // Predicated region
    $region6: #{bayes_rule.1} parent=1 // pred_check
      _
    $region7: #{bayes_rule.1} parent=1 // pred_check_branch
      %13 = sbr.rel (0) target = $region9
    $region8: #{bayes_rule.1} parent=1 // pred_region
      _
    $region9: #{bayes_rule.1} parent=1 // pred_fallthru
      _
    // Predicated region
    $region10: #{bayes_rule.1} parent=1 // pred_check
      _
    $region11: #{bayes_rule.1} parent=1 // pred_check_branch
      %15 = sbr.rel (0) target = $region13
    $region12: #{bayes_rule.1} parent=1 // pred_region
      _
    $region13: #{bayes_rule.1} parent=1 // pred_fallthru
      _
    // Predicated region
    $region14: #{bayes_rule.1} parent=1 // pred_check
      _
    $region15: #{bayes_rule.1} parent=1 // pred_check_branch
      %17 = sbr.rel (0) target = $region17
    $region16: #{bayes_rule.1} parent=1 // pred_region
      _
    $region17: #{bayes_rule.1} parent=1 // pred_fallthru
      _
    %v18 = vld [vmem:[%s0] sm:$0xff]
    %v19 = vld [vmem:[%s1] sm:$0xff]
    %v20 = vld [vmem:[%s1 + $0x8] sm:$0xff]
    %v21 = vld [vmem:[%s1 + $0x10] sm:$0xff]
    %v22 = vld [vmem:[%s1 + $0x18] sm:$0xff]
    %vm23 = vcmask 261120
    %v25 = vsel %vm23, %v18, 0
    %27 = vmatpush.msra.mxu0 0.0
    %28 = vmatpush.msra.mxu0 0.0
    %29 = vmatpush.msra.mxu0 0.0
    %30 = vmatpush.msra.mxu0 0.0
    %31 = vmatpush.msra.mxu0 0.0
    %32 = vmatpush.msra.mxu0 0.0
    %33 = vmatpush.msra.mxu0 0.0
    %34 = vmatpush.msra.mxu0 0.0
    %35 = vmatpush.msra.mxu0 0.0
    %36 = vmatpush.msra.mxu0 0.0
    %37 = vmatpush.msra.mxu0 0.0
    %38 = vmatpush.msra.mxu0 0.0
    %39 = vmatpush.msra.mxu0 %v22
    %40 = vmatpush.msra.mxu0 %v21
    %41 = vmatpush.msra.mxu0 %v20
    %42 = vmatpush.msra.mxu0 %v19
    %43 = vmatmul.f32.gmra.mxu0 %v25
    %v44 = vpop.f32.mrf.mxu0
    %v45 = vadd.f32 0.0, %v44
    %46 = vdwg.mxu0
    %v47 = vmul.f32 %v18, %v18
    %v48 = vld [vmem:[%s2] sm:$0xff]
    %v49 = vld [vmem:[%s2 + $0x8] sm:$0xff]
    %v50 = vld [vmem:[%s2 + $0x10] sm:$0xff]
    %v51 = vld [vmem:[%s2 + $0x18] sm:$0xff]
    %v53 = vsel %vm23, %v47, 0
    %55 = vmatpush.msra.mxu0 0.0
    %56 = vmatpush.msra.mxu0 0.0
    %57 = vmatpush.msra.mxu0 0.0
    %58 = vmatpush.msra.mxu0 0.0
    %59 = vmatpush.msra.mxu0 0.0
    %60 = vmatpush.msra.mxu0 0.0
    %61 = vmatpush.msra.mxu0 0.0
    %62 = vmatpush.msra.mxu0 0.0
    %63 = vmatpush.msra.mxu0 0.0
    %64 = vmatpush.msra.mxu0 0.0
    %65 = vmatpush.msra.mxu0 0.0
    %66 = vmatpush.msra.mxu0 0.0
    %67 = vmatpush.msra.mxu0 %v51
    %68 = vmatpush.msra.mxu0 %v50
    %69 = vmatpush.msra.mxu0 %v49
    %70 = vmatpush.msra.mxu0 %v48
    %71 = vmatmul.f32.gmra.mxu0 %v53
    %v72 = vpop.f32.mrf.mxu0
    %v73 = vadd.f32 0.0, %v72
    %74 = vdwg.mxu0
    %v75 = vsub.f32 %v45, %v73
    %v76 = vld [vmem:[%s3] sm:$0x1]
    %v78 = vperm.slane %v76, 0
    %v80 = vadd.f32 %v75, %v78
    %81 = vmax.xlane.f32.xlu0 %v80
    %v82 = vpop.xlane.xlu0 %81
    %v83 = vsub.f32 %v80, %v82
    %v84 = vmul.f32 %v83, 1.442695
    %v85 = vpow.pop %v84
    %86 = vadd.xlane.f32.xlu0 %v85
    %v87 = vpop.xlane.xlu0 %86
    %v88 = vlog2.pop %v87
    %v89 = vmul.f32 %v88, 0.6931472
    %v90 = vsub.f32 %v83, %v89
    %91 = vst [vmem:[#allocation2] sm:$0xff] %v90
    // Predicated region
    $region18: #{bayes_rule.1} parent=1 // pred_check
      _
    $region19: #{bayes_rule.1} parent=1 // pred_check_branch
      %93 = sbr.rel (0) target = $region21
    $region20: #{bayes_rule.1} parent=1 // pred_region
      %95 = vsyncadd [#allocation3], 0
      %s97 = sshll.u32 [#allocation2], 4
      %s98 = int_to_ptr.vmem [resolvable:$true] %s97
      %s99 = sshll.u32 %s4, 4
      %s100 = int_to_ptr.hbm [resolvable:$true] %s99
      %102 = dma.vmem_to_hbm [thread:$0]  %s98, 128, %s100, [#allocation3]
    $region21: #{bayes_rule.1} parent=1 // pred_fallthru
      _
    // Predicated region
    $region22: #{bayes_rule.1} parent=1 // pred_check
      _
    $region23: #{bayes_rule.1} parent=1 // pred_check_branch
      %104 = sbr.rel (0) target = $region25
    $region24: #{bayes_rule.1} parent=1 // pred_region
      %106 = dma.done [#allocation3], 128
    $region25: #{bayes_rule.1} parent=1 // pred_fallthru
      _
    %107 = vsyncpa [#allocation3], 1

</llo_original>
